<compile_context>
chip_gen: v5e
topology: v5e:2x2
jax: 0.10.0
libtpu: 0.0.40
codegen_flags: <defaults>
</compile_context>

<pallas_src>
import functools

import numpy as np
import jax
import jax.numpy as jnp
from jax.experimental import pallas as pl
from jax.experimental.pallas import tpu as pltpu

FILTER_SIZE = 5
PAD = (FILTER_SIZE - 2) // 2          # = 1  -> "same" spatial size at stride=1

# Separable 1D taps of the normalized 2D Hanning filter:
#   g2d = outer(a, a) / sum(outer(a, a)) = outer(a/sum(a), a/sum(a))
_A = np.hanning(FILTER_SIZE)[1:-1]
_W1D = _A / _A.sum()                  # [0.25, 0.5, 0.25]
W_M, W_C, W_P = float(_W1D[0]), float(_W1D[1]), float(_W1D[2])

_TEMPS_F32 = 8                        # conservative count of live block-sized f32 temps
_MIN_PREFERRED_BLOCK = 256 * 1024     # don't shrink blocks below this just to add steps


def _vmem_capacity_bytes():
    """Per-core VMEM capacity of the current chip, with a conservative fallback."""
    try:
        return int(pltpu.get_tpu_info().vmem_capacity_bytes)
    except Exception:
        return 64 * 1024 * 1024       # v7x per-TensorCore size: safe on all generations


def _choose_c_tile(C, HW, itemsize, n_batch, vmem_budget):
    """Pick a sublane-aligned channel tile sized against the real VMEM footprint.

    Footprint = 2x double-buffered input + output blocks at the I/O dtype plus
    ~_TEMPS_F32 block-sized f32 temporaries (all in-kernel math is f32).
    Prefers >=4 total grid steps (>=2 so both v7x TensorCores get work) while
    keeping blocks >= _MIN_PREFERRED_BLOCK.
    """
    if C % 8 == 0:
        cands = [t for t in range(8, C + 1, 8) if C % t == 0]   # ascending
    else:
        cands = [C]                   # tile must equal the full dim in that case

    def blk_bytes(t):
        return t * HW * itemsize

    def footprint(t):
        return 4 * blk_bytes(t) + _TEMPS_F32 * t * HW * 4

    def steps(t):
        return n_batch * (C // t)

    fitting = [t for t in cands if footprint(t) <= vmem_budget]
    if not fitting:
        # TODO(synk): spatial (H-halo) tiling for the extreme case where even an
        # 8-channel block overflows VMEM; no TReS stage comes close to this.
        return cands[0]
    best = fitting[-1]                              # largest fitting tile
    if steps(best) < 2:                             # keep both v7x TensorCores busy
        two = [t for t in fitting if steps(t) >= 2]
        if two:
            best = two[-1]
    if steps(best) < 4:                             # hide pipeline prologue/epilogue
        four = [t for t in fitting
                if steps(t) >= 4 and blk_bytes(t) >= _MIN_PREFERRED_BLOCK]
        if four:
            best = four[-1]
    return best


def _make_tap_weights(H, W):
    """(4, H*W) f32 off-center tap weights with the zero-padding boundary folded in.

    Rows: [up (h-1), down (h+1), left (w-1), right (w+1)] tap weight per
    flattened spatial position (0 where the neighbour falls outside the image).
    """
    p = np.arange(H * W)
    w = np.empty((4, H * W), np.float32)
    w[0] = W_M * (p >= W)                   # valid iff h > 0
    w[1] = W_P * (p < (H - 1) * W)          # valid iff h < H-1
    w[2] = W_M * ((p % W) != 0)             # valid iff w > 0
    w[3] = W_P * ((p % W) != (W - 1))       # valid iff w < W-1
    return jnp.asarray(w)


def _l2pool_kernel(w_ref, x_ref, o_ref, *, width):
    # x_ref/o_ref: (1, ct, HW) blocks -- flattened spatial on lanes, channel
    # tile on sublanes.  w_ref: (4, HW) per-position boundary-masked tap weights.
    x = x_ref[0].astype(jnp.float32)        # (ct, HW); no-op cast for f32 inputs
    x2 = x * x

    w_up = w_ref[0:1, :]
    w_dn = w_ref[1:2, :]
    w_lf = w_ref[2:3, :]
    w_rt = w_ref[3:4, :]

    # Separable 3-tap pass along H: neighbours sit at +-W on the flattened axis.
    # Values that wrap across the image border are zeroed by the tap weights.
    t = (W_C * x2
         + w_up * jnp.roll(x2, width, axis=1)
         + w_dn * jnp.roll(x2, -width, axis=1))
    # Separable 3-tap pass along W: neighbours sit at +-1 on the flattened axis.
    y = (W_C * t
         + w_lf * jnp.roll(t, 1, axis=1)
         + w_rt * jnp.roll(t, -1, axis=1))

    o_ref[0] = jnp.sqrt(y + 1e-12).astype(o_ref.dtype)


def l2pooling(x, stride=1):
    """x: (N, C, H, W) -- same layout/semantics as the PyTorch module's forward."""
    N, C, H, W = x.shape
    HW = H * W
    x3 = x.reshape(N, C, HW)                # trailing-dim merge: layout no-op

    cap = _vmem_capacity_bytes()
    vmem_budget = cap // 2
    ct = _choose_c_tile(C, HW, jnp.dtype(x.dtype).itemsize, N, vmem_budget)
    vmem_limit = int(max(32 << 20, min(cap - (16 << 20), vmem_budget + (16 << 20))))

    w_taps = _make_tap_weights(H, W)

    # TODO(synk): optional bf16 compute path for bf16 activations on v6e/v7x
    # (native bf16 VPU); kept f32 here so numerics match the f32 reference.
    y3 = pl.pallas_call(
        functools.partial(_l2pool_kernel, width=W),
        out_shape=jax.ShapeDtypeStruct((N, C, HW), x.dtype),
        grid=(N, C // ct),
        in_specs=[
            pl.BlockSpec((4, HW), lambda n, c: (0, 0)),          # tap weights
            pl.BlockSpec((1, ct, HW), lambda n, c: (n, c, 0)),   # activations
        ],
        out_specs=pl.BlockSpec((1, ct, HW), lambda n, c: (n, c, 0)),
        compiler_params=pltpu.CompilerParams(
            dimension_semantics=("parallel", "parallel"),
            vmem_limit_bytes=vmem_limit),
    )(w_taps, x3)

    y = y3.reshape(N, C, H, W)              # trailing-dim split: layout no-op
    if stride != 1:
        # F.conv2d(stride=s, pad=1, k=3) keeps positions 0, s, 2s, ... of the
        # stride-1 result.
        y = y[:, :, ::stride, ::stride]
    return y


def _reference(x, stride=1):
    """Pure-JAX reference mirroring F.conv2d(groups=C) in NCHW."""
    C = x.shape[1]
    a = np.hanning(FILTER_SIZE)[1:-1]
    g = a[:, None] * a[None, :]
    g = g / g.sum()
    filt = jnp.broadcast_to(jnp.asarray(g, jnp.float32)[None, None], (C, 1, 3, 3))
    out = jax.lax.conv_general_dilated(
        x ** 2, filt, window_strides=(stride, stride),
        padding=((PAD, PAD), (PAD, PAD)),
        dimension_numbers=("NCHW", "OIHW", "NCHW"),
        feature_group_count=C,
        precision=jax.lax.Precision.HIGHEST)
    return jnp.sqrt(out + 1e-12)


if __name__ == "__main__":
    key = jax.random.PRNGKey(0)
    k1, k2, k3 = jax.random.split(key, 3)

    # 1) Small NCHW shape matching the module interface (default stride=1).
    x_small = jax.random.normal(k1, (2, 4, 16, 16), dtype=jnp.float32)
    y1 = jax.block_until_ready(l2pooling(x_small))
    np.testing.assert_allclose(np.asarray(y1), np.asarray(_reference(x_small)),
                               rtol=1e-5, atol=1e-5)

    # 2) TReS-like stage (C multiple of 128) to exercise channel tiling and the
    #    lane-dense flattened-spatial path (grid has multiple steps).
    x_dense = jax.random.normal(k2, (1, 256, 28, 28), dtype=jnp.float32)
    y2 = jax.block_until_ready(l2pooling(x_dense))
    np.testing.assert_allclose(np.asarray(y2), np.asarray(_reference(x_dense)),
                               rtol=1e-5, atol=1e-5)

    # 3) Odd spatial dims + stride=2: exercises the boundary tap-weight vectors
    #    and the strided-output path.
    x_odd = jax.random.normal(k3, (1, 8, 13, 11), dtype=jnp.float32)
    y3 = jax.block_until_ready(l2pooling(x_odd, stride=2))
    np.testing.assert_allclose(np.asarray(y3),
                               np.asarray(_reference(x_odd, stride=2)),
                               rtol=1e-5, atol=1e-5)

    print("KERNEL_OK")
</pallas_src>

<mosaic_0001>
module attributes {stable_mosaic.version = 11 : i64} {
  func.func @_l2pool_kernel(%arg0: i32, %arg1: i32, %arg2: memref<4x256xf32, #tpu.memory_space<vmem>>, %arg3: memref<1x4x256xf32, #tpu.memory_space<vmem>>, %arg4: memref<1x4x256xf32, #tpu.memory_space<vmem>>) attributes {dimension_semantics = [#tpu.dimension_semantics<parallel>, #tpu.dimension_semantics<parallel>], iteration_bounds = array<i64: 2, 1>, scalar_prefetch = 0 : i64, scratch_operands = 0 : i64, tpu.core_type = #tpu.core_type<tc>, window_params = [{pipeline_mode = #tpu.pipeline_mode<synchronous>, transform_indices = @transform_0, window_bounds = array<i64: 4, 256>}, {transform_indices = @transform_1, window_bounds = array<i64: 1, 4, 256>}, {transform_indices = @transform_2, window_bounds = array<i64: 1, 4, 256>}]} {
    %c0 = arith.constant 0 : index
    %c0_0 = arith.constant 0 : index
    %c0_1 = arith.constant 0 : index
    %0 = vector.load %arg3[%c0, %c0_0, %c0_1] : memref<1x4x256xf32, #tpu.memory_space<vmem>>, vector<1x4x256xf32>
    %1 = vector.shape_cast %0 : vector<1x4x256xf32> to vector<4x256xf32>
    %2 = arith.mulf %1, %1 : vector<4x256xf32>
    %c0_2 = arith.constant 0 : index
    %c0_3 = arith.constant 0 : index
    %3 = vector.load %arg2[%c0_2, %c0_3] : memref<4x256xf32, #tpu.memory_space<vmem>>, vector<1x256xf32>
    %c1 = arith.constant 1 : index
    %c0_4 = arith.constant 0 : index
    %4 = vector.load %arg2[%c1, %c0_4] : memref<4x256xf32, #tpu.memory_space<vmem>>, vector<1x256xf32>
    %c2 = arith.constant 2 : index
    %c0_5 = arith.constant 0 : index
    %5 = vector.load %arg2[%c2, %c0_5] : memref<4x256xf32, #tpu.memory_space<vmem>>, vector<1x256xf32>
    %c3 = arith.constant 3 : index
    %c0_6 = arith.constant 0 : index
    %6 = vector.load %arg2[%c3, %c0_6] : memref<4x256xf32, #tpu.memory_space<vmem>>, vector<1x256xf32>
    %cst = arith.constant 5.000000e-01 : f32
    %7 = vector.broadcast %cst : f32 to vector<4x256xf32>
    %8 = arith.mulf %7, %2 : vector<4x256xf32>
    %9 = vector.extract_strided_slice %2 {offsets = [0, 240], sizes = [4, 16], strides = [1, 1]} : vector<4x256xf32> to vector<4x16xf32>
    %10 = vector.extract_strided_slice %2 {offsets = [0, 0], sizes = [4, 240], strides = [1, 1]} : vector<4x256xf32> to vector<4x240xf32>
    %11 = tpu.concatenate %9, %10 in 1 : vector<4x16xf32>, vector<4x240xf32> -> vector<4x256xf32>
    %12 = vector.broadcast %3 : vector<1x256xf32> to vector<4x256xf32>
    %13 = arith.mulf %12, %11 : vector<4x256xf32>
    %14 = arith.addf %8, %13 : vector<4x256xf32>
    %15 = vector.extract_strided_slice %2 {offsets = [0, 16], sizes = [4, 240], strides = [1, 1]} : vector<4x256xf32> to vector<4x240xf32>
    %16 = vector.extract_strided_slice %2 {offsets = [0, 0], sizes = [4, 16], strides = [1, 1]} : vector<4x256xf32> to vector<4x16xf32>
    %17 = tpu.concatenate %15, %16 in 1 : vector<4x240xf32>, vector<4x16xf32> -> vector<4x256xf32>
    %18 = vector.broadcast %4 : vector<1x256xf32> to vector<4x256xf32>
    %19 = arith.mulf %18, %17 : vector<4x256xf32>
    %20 = arith.addf %14, %19 : vector<4x256xf32>
    %cst_7 = arith.constant 5.000000e-01 : f32
    %21 = vector.broadcast %cst_7 : f32 to vector<4x256xf32>
    %22 = arith.mulf %21, %20 : vector<4x256xf32>
    %23 = vector.extract_strided_slice %20 {offsets = [0, 255], sizes = [4, 1], strides = [1, 1]} : vector<4x256xf32> to vector<4x1xf32>
    %24 = vector.extract_strided_slice %20 {offsets = [0, 0], sizes = [4, 255], strides = [1, 1]} : vector<4x256xf32> to vector<4x255xf32>
    %25 = tpu.concatenate %23, %24 in 1 : vector<4x1xf32>, vector<4x255xf32> -> vector<4x256xf32>
    %26 = vector.broadcast %5 : vector<1x256xf32> to vector<4x256xf32>
    %27 = arith.mulf %26, %25 : vector<4x256xf32>
    %28 = arith.addf %22, %27 : vector<4x256xf32>
    %29 = vector.extract_strided_slice %20 {offsets = [0, 1], sizes = [4, 255], strides = [1, 1]} : vector<4x256xf32> to vector<4x255xf32>
    %30 = vector.extract_strided_slice %20 {offsets = [0, 0], sizes = [4, 1], strides = [1, 1]} : vector<4x256xf32> to vector<4x1xf32>
    %31 = tpu.concatenate %29, %30 in 1 : vector<4x255xf32>, vector<4x1xf32> -> vector<4x256xf32>
    %32 = vector.broadcast %6 : vector<1x256xf32> to vector<4x256xf32>
    %33 = arith.mulf %32, %31 : vector<4x256xf32>
    %34 = arith.addf %28, %33 : vector<4x256xf32>
    %cst_8 = arith.constant 9.99999996E-13 : f32
    %35 = vector.broadcast %cst_8 : f32 to vector<4x256xf32>
    %36 = arith.addf %34, %35 : vector<4x256xf32>
    %37 = math.sqrt %36 : vector<4x256xf32>
    %c0_9 = arith.constant 0 : index
    %c0_10 = arith.constant 0 : index
    %c0_11 = arith.constant 0 : index
    %38 = vector.load %arg4[%c0_9, %c0_10, %c0_11] : memref<1x4x256xf32, #tpu.memory_space<vmem>>, vector<1x4x256xf32>
    %39 = vector.shape_cast %38 : vector<1x4x256xf32> to vector<4x256xf32>
    %40 = vector.shape_cast %37 : vector<4x256xf32> to vector<1x4x256xf32>
    tpu.vector_store %arg4[%c0_9, %c0_10, %c0_11], %40 {strides = array<i32>} : memref<1x4x256xf32, #tpu.memory_space<vmem>>, vector<1x4x256xf32>,
    return
  }
  func.func @transform_0(%arg0: i32, %arg1: i32) -> (i32, i32) {
    %c0_i32 = arith.constant 0 : i32
    %c0_i32_0 = arith.constant 0 : i32
    %c0_i32_1 = arith.constant 0 : i32
    return %c0_i32, %c0_i32_0 : i32, i32
  }
  func.func @transform_1(%arg0: i32, %arg1: i32) -> (i32, i32, i32) {
    %c0_i32 = arith.constant 0 : i32
    %c0_i32_0 = arith.constant 0 : i32
    return %arg0, %arg1, %c0_i32 : i32, i32, i32
  }
  func.func @transform_2(%arg0: i32, %arg1: i32) -> (i32, i32, i32) {
    %c0_i32 = arith.constant 0 : i32
    %c0_i32_0 = arith.constant 0 : i32
    return %arg0, %arg1, %c0_i32 : i32, i32, i32
  }
}

</mosaic_0001>

<llo_original>
// kernel: tpu_custom_call.1
$region0: #{tpu_custom_call.1}
  #allocation0 [shape = 'u32[]', space=smem, size = 0x4, offset = 0x4, fixed_abs, tag = 'smem constant byte address 0x4 - core index']
  #allocation1 [shape = 'u32[72,128]{1,0:T(1,128)}', space=vmem, size = 0x9000, scoped, tag = 'internal scratch']
  %s0 = inlined_call_operand.hbm [shape: f32[4,256], index: 0, kind: input, shape index: {}]
  %s1 = inlined_call_operand.hbm [shape: f32[2,4,256], index: 1, kind: input, shape index: {}]
  %s2 = inlined_call_operand.hbm [shape: f32[2,4,256], index: 2, kind: output, shape index: {}]
  %s3 = sld [smem:[#allocation0]]
  $region49: #{tpu_custom_call.1} parent=0
    _
  %s5 = ssub.s32 1, %s3
  %s6 = scalar_select 0, %s5, %s3
  $region1: #{tpu_custom_call.1} parent=0
    #allocation2 [shape = 'u8[4096]{0}', space=vmem, size = 0x1000, scoped, tag = 'input window, operand 0, single buffered']
    #allocation3 [shape = 's32[2]{0}', space=sflag, size = 0x8, scoped, tag = 'scoped memory for tpu_custom_call.1']
    #allocation4 [shape = 's32[2]{0}', space=sflag, size = 0x8, scoped, tag = 'scoped memory for tpu_custom_call.1']
    #allocation5 [shape = 'u8[8192]{0}', space=vmem, size = 0x2000, scoped, tag = 'input window, operand 1']
    #allocation6 [shape = 's32[2]{0}', space=sflag, size = 0x8, scoped, tag = 'scoped memory for tpu_custom_call.1']
    #allocation7 [shape = 'u8[8192]{0}', space=vmem, size = 0x2000, scoped, tag = 'output window, operand 0']
    %7 = vsyncpa [#allocation3], 0
    %8 = vsyncpa [#allocation6], 0
    %s9 = scalar_lea.sflag [#allocation6], 1
    %10 = vsyncpa %s9, 0
    %11 = vsyncpa [#allocation4], 0
    %s12 = scalar_lea.sflag [#allocation4], 1
    %13 = vsyncpa %s12, 0
    loop: start=0, step=1, limit=4
    $region2: #{tpu_custom_call.1} parent=1 // loop_pre_header
      _
    $region3: #{tpu_custom_call.1} parent=1 // loop_header
      %s15 = sphi 0, %s19
      %p16 = scmp.ge.s32.totalorder %s15, 4
      %s22 = sphi 0, %s34
      %s23 = sphi 0, %s30
      %s24 = sphi 0, %s22
      %s25 = sphi 0, %s23
      %s26 = sphi 0, %s24
      %s27 = sphi 0, %s25
      %s35 = sphi 0, %s35
      %s37 = sphi 0, %s35
      %s38 = sphi 0, %s37
      %s52 = sphi 0, %s38
      %s60 = sphi 0, %s62
      %s63 = sphi 0, %s60
      %s64 = sphi 0, %s63
      %s80 = sphi 0, %s64
      %s88 = sphi 0, %s90
      %s91 = sphi 0, %s88
      %s92 = sphi 0, %s91
      %s108 = sphi 0, %s92
    $region4: #{tpu_custom_call.1} parent=1 // loop_header_branch
      %18 = sbr.rel (%p16) target = $region8
    $region5: #{tpu_custom_call.1} parent=1 // loop_body
      %s20 = ssub.s32 %s15, 1
      %s21 = ssub.s32 %s15, 2
      %s28 = sadd.s32 1, %s23
      %p29 = scmp.ge.s32.totalorder %s28, 1
      %s30 = scalar_select %p29, 0, %s28
      %s31 = sadd.s32 1, %s22
      %s32 = scalar_select %p29, %s31, %s22
      %p33 = scmp.ge.s32.totalorder %s32, 2
      %s34 = scalar_select %p33, 0, %s32
      %s36 = sadd.s32 %s35, 1
      %p39 = scmp.eq.s32.totalorder %s15, 1
      %p40 = scmp.ne.s32.totalorder %s35, %s37
      %p41 = scmp.eq.s32.totalorder %s15, 0
      %p42 = por %p40, %p41
      %p43 = scmp.ne.s32.totalorder %s35, %s37
      %p44 = scmp.eq.s32.totalorder %s20, 1
      %p45 = por %p43, %p44
      %p46 = scmp.ne.s32.totalorder %s37, %s38
      %p47 = scmp.eq.s32.totalorder %s20, 0
      %p48 = por %p46, %p47
      %p49 = scmp.ne.s32.totalorder %s37, %s38
      %p50 = scmp.eq.s32.totalorder %s21, 1
      %p51 = por %p49, %p50
      %p53 = scmp.ne.s32.totalorder %s38, %s52
      %p54 = scmp.eq.s32.totalorder %s21, 0
      %p55 = por %p53, %p54
      %s56 = ssub.s32 %s22, %s34
      %s57 = ssub.s32 %s23, %s30
      %s58 = sor.u32 %s56, %s57
      %p59 = scmp.eq.s32.totalorder %s58, 0
      %s61 = sadd.s32 %s60, 1
      %s62 = scalar_select %p59, %s60, %s61
      %p65 = pneg %p59
      %p66 = scmp.eq.s32.totalorder %s15, 1
      %p67 = por %p65, %p66
      %p68 = scmp.ne.s32.totalorder %s60, %s63
      %p69 = scmp.eq.s32.totalorder %s15, 0
      %p70 = por %p68, %p69
      %p71 = scmp.ne.s32.totalorder %s60, %s63
      %p72 = scmp.eq.s32.totalorder %s20, 1
      %p73 = por %p71, %p72
      %p74 = scmp.ne.s32.totalorder %s63, %s64
      %p75 = scmp.eq.s32.totalorder %s20, 0
      %p76 = por %p74, %p75
      %p77 = scmp.ne.s32.totalorder %s63, %s64
      %p78 = scmp.eq.s32.totalorder %s21, 1
      %p79 = por %p77, %p78
      %p81 = scmp.ne.s32.totalorder %s64, %s80
      %p82 = scmp.eq.s32.totalorder %s21, 0
      %p83 = por %p81, %p82
      %s84 = ssub.s32 %s22, %s34
      %s85 = ssub.s32 %s23, %s30
      %s86 = sor.u32 %s84, %s85
      %p87 = scmp.eq.s32.totalorder %s86, 0
      %s89 = sadd.s32 %s88, 1
      %s90 = scalar_select %p87, %s88, %s89
      %p93 = pneg %p87
      %p94 = scmp.eq.s32.totalorder %s15, 1
      %p95 = por %p93, %p94
      %p96 = scmp.ne.s32.totalorder %s88, %s91
      %p97 = scmp.eq.s32.totalorder %s15, 0
      %p98 = por %p96, %p97
      %p99 = scmp.ne.s32.totalorder %s88, %s91
      %p100 = scmp.eq.s32.totalorder %s20, 1
      %p101 = por %p99, %p100
      %p102 = scmp.ne.s32.totalorder %s91, %s92
      %p103 = scmp.eq.s32.totalorder %s20, 0
      %p104 = por %p102, %p103
      %p105 = scmp.ne.s32.totalorder %s91, %s92
      %p106 = scmp.eq.s32.totalorder %s21, 1
      %p107 = por %p105, %p106
      %p109 = scmp.ne.s32.totalorder %s92, %s108
      %p110 = scmp.eq.s32.totalorder %s21, 0
      %p111 = por %p109, %p110
      %p112 = scmp.le.s32.totalorder 1, %s15
      %p113 = scmp.lt.s32.totalorder %s15, 3
      %p114 = pnand %p112, %p113
      %p115 = pneg %p114
      // Predicated region
      $region9: #{tpu_custom_call.1} parent=5 // pred_check
        _
      $region10: #{tpu_custom_call.1} parent=5 // pred_check_branch
        %117 = sbr.rel (%p114) target = $region12
      $region11: #{tpu_custom_call.1} parent=5 // pred_region
        %s118 = ssub.s32 %s15, 1
        // Predicated region
        $region13: #{tpu_custom_call.1} parent=11 // pred_check
          %p119 = pneg %p48
        $region14: #{tpu_custom_call.1} parent=11 // pred_check_branch
          %121 = sbr.rel (%p119) target = $region16
        $region15: #{tpu_custom_call.1} parent=11 // pred_region
          %123 = vsyncadd [#allocation3], 0
          %s125 = sshll.u32 %s0, 4
          %s126 = int_to_ptr.hbm [resolvable:$true] %s125
          %s127 = sshll.u32 [#allocation2], 4
          %s128 = int_to_ptr.vmem [resolvable:$true] %s127
          %130 = dma.hbm_to_vmem [thread:$0]  %s126, 128, %s128, [#allocation3]
        $region16: #{tpu_custom_call.1} parent=11 // pred_fallthru
          _
      $region12: #{tpu_custom_call.1} parent=5 // pred_fallthru
        _
      %p131 = scmp.lt.s32.totalorder %s15, 2
      // Predicated region
      $region17: #{tpu_custom_call.1} parent=5 // pred_check
        %p132 = pneg %p131
      $region18: #{tpu_custom_call.1} parent=5 // pred_check_branch
        %134 = sbr.rel (%p132) target = $region20
      $region19: #{tpu_custom_call.1} parent=5 // pred_region
        // Predicated region
        $region21: #{tpu_custom_call.1} parent=19 // pred_check
          %p135 = pneg %p70
        $region22: #{tpu_custom_call.1} parent=19 // pred_check_branch
          %137 = sbr.rel (%p135) target = $region24
        $region23: #{tpu_custom_call.1} parent=19 // pred_region
          %s138 = sand.u32 %s60, 1
          %s139 = scalar_lea.sflag [#allocation6], %s138
          %s140 = sand.u32 %s60, 1
          %s141 = smul.addr %s140, 8
          %s142 = scalar_lea.vmem [#allocation5], %s141
          %144 = vsyncadd %s139, 0
          %s145 = smul.addr %s23, 2
          %s146 = smul.addr %s22, 2
          %s147 = sadd.s32 %s145, %s146
          %s148 = smul.addr %s147, 4
          %s149 = scalar_lea.hbm %s1, %s148
          %s151 = sshll.u32 %s149, 4
          %s152 = int_to_ptr.hbm [resolvable:$true] %s151
          %s153 = sshll.u32 %s142, 4
          %s154 = int_to_ptr.vmem [resolvable:$true] %s153
          %156 = dma.hbm_to_vmem [thread:$0]  %s152, 128, %s154, %s139
        $region24: #{tpu_custom_call.1} parent=19 // pred_fallthru
          _
      $region20: #{tpu_custom_call.1} parent=5 // pred_fallthru
        _
      %p157 = scmp.le.s32.totalorder 1, %s15
      %p158 = scmp.lt.s32.totalorder %s15, 3
      %p159 = pnand %p157, %p158
      %p160 = pneg %p159
      // Predicated region
      $region25: #{tpu_custom_call.1} parent=5 // pred_check
        _
      $region26: #{tpu_custom_call.1} parent=5 // pred_check_branch
        %162 = sbr.rel (%p159) target = $region28
      $region27: #{tpu_custom_call.1} parent=5 // pred_region
        %s163 = ssub.s32 %s15, 1
        // Predicated region
        $region29: #{tpu_custom_call.1} parent=27 // pred_check
          %p164 = pneg %p48
        $region30: #{tpu_custom_call.1} parent=27 // pred_check_branch
          %166 = sbr.rel (%p164) target = $region32
        $region31: #{tpu_custom_call.1} parent=27 // pred_region
          %168 = dma.done [#allocation3], 128
        $region32: #{tpu_custom_call.1} parent=27 // pred_fallthru
          _
        %s169 = sand.u32 %s63, 1
        %s170 = scalar_lea.sflag [#allocation6], %s169
        %s171 = sand.u32 %s63, 1
        %s172 = smul.addr %s171, 8
        %s173 = scalar_lea.vmem [#allocation5], %s172
        // Predicated region
        $region33: #{tpu_custom_call.1} parent=27 // pred_check
          %p174 = pneg %p76
        $region34: #{tpu_custom_call.1} parent=27 // pred_check_branch
          %176 = sbr.rel (%p174) target = $region36
        $region35: #{tpu_custom_call.1} parent=27 // pred_region
          %178 = dma.done %s170, 128
        $region36: #{tpu_custom_call.1} parent=27 // pred_fallthru
          _
        %p179 = pneg %p48
        %p180 = pneg %p45
        %s181 = sand.u32 %s63, 1
        %s182 = scalar_lea.sflag [#allocation6], %s181
        %s183 = sand.u32 %s63, 1
        %s184 = smul.addr %s183, 8
        %s185 = scalar_lea.vmem [#allocation5], %s184
        %p186 = pneg %p76
        %p187 = pneg %p73
        %p188 = pneg %p104
        %p189 = pneg %p101
        %s190 = sand.u32 %s91, 1
        %s191 = scalar_lea.sflag [#allocation4], %s190
        %s192 = sand.u32 %s91, 1
        %s193 = smul.addr %s192, 8
        %s194 = scalar_lea.vmem [#allocation7], %s193
        %v195 = vld [vmem:[%s173] sm:$0xff]
        %v196 = vmul.f32 %v195, %v195
        %v197 = vld [vmem:[#allocation2] ss:$4 sm:$0x3]
        %s198 = scalar_lea.vmem [#allocation2], 1
        %v199 = vld [vmem:[%s198] ss:$4 sm:$0x3]
        %s200 = scalar_lea.vmem [#allocation2], 2
        %v201 = vld [vmem:[%s200] ss:$4 sm:$0x3]
        %s202 = scalar_lea.vmem [#allocation2], 3
        %v203 = vld [vmem:[%s202] ss:$4 sm:$0x3]
        %v204 = vmul.f32 %v196, 0.5
        %206 = vst [vmem:[#allocation1] ss:$2 sm:$0xff] %v196
        %v207 = vld.sshfl [vmem:[#allocation1 + $0x8] sm:$0xff pattern:$0x75316420]
        %208 = vrot.lane.b32.xlu0 %v207, 16
        %v209 = vpop.permute.xlu0 %208
        %211 = vst [vmem:[#allocation1] ss:$2 sm:$0xff] %v196
        %v212 = vld.sshfl [vmem:[#allocation1] sm:$0xff pattern:$0x75316420]
        %v213 = vld.sshfl [vmem:[#allocation1 + $0x8] sm:$0xff pattern:$0x75316420]
        %214 = vrot.lane.b32.xlu0 %v212, 16
        %v215 = vpop.permute.xlu0 %214
        %216 = vrot.lane.b32.xlu0 %v213, 16
        %v217 = vpop.permute.xlu0 %216
        %vm218 = vcmask 130048
        %v219 = vsel %vm218, %v215, %v217
        %v222 = vsel %vm218, %v209, %v215
        %v224 = vperm.slane %v197, 0
        %v225 = vperm.slane %v197, 1
        %v228 = vmul.f32 %v224, %v222
        %v229 = vmul.f32 %v225, %v219
        %v232 = vrot.slane %v229, 4
        %vm233 = vcmask 1043456
        %v234 = vsel %vm233, %v228, %v232
        %v236 = vadd.f32 %v204, %v234
        %237 = vst [vmem:[#allocation1] ss:$2 sm:$0xff] %v196
        %v238 = vld.sshfl [vmem:[#allocation1] sm:$0xff pattern:$0x75316420]
        %v239 = vld.sshfl [vmem:[#allocation1 + $0x8] sm:$0xff pattern:$0x75316420]
        %240 = vrot.lane.b32.xlu0 %v238, 112
        %v241 = vpop.permute.xlu0 %240
        %242 = vrot.lane.b32.xlu0 %v239, 112
        %v243 = vpop.permute.xlu0 %242
        %vm244 = vcmask 916480
        %v245 = vsel %vm244, %v241, %v243
        %248 = vst [vmem:[#allocation1] ss:$2 sm:$0xff] %v196
        %v249 = vld.sshfl [vmem:[#allocation1] sm:$0xff pattern:$0x75316420]
        %250 = vrot.lane.b32.xlu0 %v249, 112
        %v251 = vpop.permute.xlu0 %250
        %v253 = vsel %vm244, %v243, %v251
        %v255 = vperm.slane %v199, 0
        %v256 = vperm.slane %v199, 1
        %v259 = vmul.f32 %v255, %v245
        %v260 = vmul.f32 %v256, %v253
        %v263 = vrot.slane %v260, 4
        %v264 = vsel %vm233, %v259, %v263
        %v266 = vadd.f32 %v236, %v264
        %v267 = vmul.f32 %v266, 0.5
        %269 = vst [vmem:[#allocation1] ss:$2 sm:$0xff] %v266
        %v270 = vld.sshfl [vmem:[#allocation1 + $0x8] sm:$0xff pattern:$0x75316420]
        %271 = vrot.lane.b32.xlu0 %v270, 1
        %v272 = vpop.permute.xlu0 %271
        %274 = vst [vmem:[#allocation1] ss:$2 sm:$0xff] %v266
        %v275 = vld.sshfl [vmem:[#allocation1] sm:$0xff pattern:$0x75316420]
        %v276 = vld.sshfl [vmem:[#allocation1 + $0x8] sm:$0xff pattern:$0x75316420]
        %277 = vrot.lane.b32.xlu0 %v275, 1
        %v278 = vpop.permute.xlu0 %277
        %279 = vrot.lane.b32.xlu0 %v276, 1
        %v280 = vpop.permute.xlu0 %279
        %vm281 = vcmask 7168
        %v282 = vsel %vm281, %v278, %v280
        %v285 = vsel %vm281, %v272, %v278
        %v287 = vperm.slane %v201, 0
        %v288 = vperm.slane %v201, 1
        %v291 = vmul.f32 %v287, %v285
        %v292 = vmul.f32 %v288, %v282
        %v295 = vrot.slane %v292, 4
        %v296 = vsel %vm233, %v291, %v295
        %v298 = vadd.f32 %v267, %v296
        %299 = vst [vmem:[#allocation1] ss:$2 sm:$0xff] %v266
        %v300 = vld.sshfl [vmem:[#allocation1] sm:$0xff pattern:$0x75316420]
        %v301 = vld.sshfl [vmem:[#allocation1 + $0x8] sm:$0xff pattern:$0x75316420]
        %302 = vrot.lane.b32.xlu0 %v300, 127
        %v303 = vpop.permute.xlu0 %302
        %304 = vrot.lane.b32.xlu0 %v301, 127
        %v305 = vpop.permute.xlu0 %304
        %vm306 = vcmask 1039360
        %v307 = vsel %vm306, %v303, %v305
        %310 = vst [vmem:[#allocation1] ss:$2 sm:$0xff] %v266
        %v311 = vld.sshfl [vmem:[#allocation1] sm:$0xff pattern:$0x75316420]
        %312 = vrot.lane.b32.xlu0 %v311, 127
        %v313 = vpop.permute.xlu0 %312
        %v315 = vsel %vm306, %v305, %v313
        %v317 = vperm.slane %v203, 0
        %v318 = vperm.slane %v203, 1
        %v321 = vmul.f32 %v317, %v307
        %v322 = vmul.f32 %v318, %v315
        %v325 = vrot.slane %v322, 4
        %v326 = vsel %vm233, %v321, %v325
        %v328 = vadd.f32 %v298, %v326
        %v329 = vadd.f32 %v328, 1e-12
        %v330 = vrsqrt.pop %v329
        %v331 = vmul.f32 %v330, %v329
        %v332 = vmul.f32 %v331, %v330
        %v333 = vmul.f32 0.5, %v332
        %v334 = vsub.f32 1.5, %v333
        %v335 = vmul.f32 %v330, %v334
        %v336 = vmul.f32 %v329, %v335
        %vm337 = vcmp.eq.f32.partialorder %v329, inf
        %v338 = vsel %vm337, %v329, %v336
        %vm339 = vcmp.eq.f32.partialorder %v329, 0.0
        %v340 = vand.u32 %v329, 2147483648
        %v341 = vsel %vm339, %v340, %v338
        %342 = vst [vmem:[%s194] sm:$0xff] %v341
        %s343 = sand.u32 %s91, 1
        %s344 = scalar_lea.sflag [#allocation4], %s343
        %s345 = sand.u32 %s91, 1
        %s346 = smul.addr %s345, 8
        %s347 = scalar_lea.vmem [#allocation7], %s346
        // Predicated region
        $region37: #{tpu_custom_call.1} parent=27 // pred_check
          %p348 = pneg %p101
        $region38: #{tpu_custom_call.1} parent=27 // pred_check_branch
          %350 = sbr.rel (%p348) target = $region40
        $region39: #{tpu_custom_call.1} parent=27 // pred_region
          %352 = vsyncadd %s344, 0
          %s353 = smul.addr %s25, 2
          %s354 = smul.addr %s24, 2
          %s355 = sadd.s32 %s353, %s354
          %s356 = smul.addr %s355, 4
          %s357 = scalar_lea.hbm %s2, %s356
          %s359 = sshll.u32 %s347, 4
          %s360 = int_to_ptr.vmem [resolvable:$true] %s359
          %s361 = sshll.u32 %s357, 4
          %s362 = int_to_ptr.hbm [resolvable:$true] %s361
          %364 = dma.vmem_to_hbm [thread:$0]  %s360, 128, %s362, %s344
        $region40: #{tpu_custom_call.1} parent=27 // pred_fallthru
          _
      $region28: #{tpu_custom_call.1} parent=5 // pred_fallthru
        _
      %p365 = scmp.le.s32.totalorder 2, %s15
      // Predicated region
      $region41: #{tpu_custom_call.1} parent=5 // pred_check
        %p366 = pneg %p365
      $region42: #{tpu_custom_call.1} parent=5 // pred_check_branch
        %368 = sbr.rel (%p366) target = $region44
      $region43: #{tpu_custom_call.1} parent=5 // pred_region
        %s369 = ssub.s32 %s15, 2
        // Predicated region
        $region45: #{tpu_custom_call.1} parent=43 // pred_check
          %p370 = pneg %p107
        $region46: #{tpu_custom_call.1} parent=43 // pred_check_branch
          %372 = sbr.rel (%p370) target = $region48
        $region47: #{tpu_custom_call.1} parent=43 // pred_region
          %s373 = sand.u32 %s92, 1
          %s374 = scalar_lea.sflag [#allocation4], %s373
          %s375 = sand.u32 %s92, 1
          %s376 = smul.addr %s375, 8
          %s377 = scalar_lea.vmem [#allocation7], %s376
          %379 = dma.done %s374, 128
        $region48: #{tpu_custom_call.1} parent=43 // pred_fallthru
          _
      $region44: #{tpu_custom_call.1} parent=5 // pred_fallthru
        _
    $region6: #{tpu_custom_call.1} parent=1 // loop_footer
      %s19 = sadd.s32 1, %s15
    $region7: #{tpu_custom_call.1} parent=1 // loop_footer_branch
      %14 = sbr.rel target = $region3
    $region8: #{tpu_custom_call.1} parent=1 // loop_exit
      _
    %380 = vsyncpa [#allocation3], 1
    %s381 = scalar_lea.sflag [#allocation3], 1
    %382 = vsyncpa %s381, 1
    %383 = vsyncpa [#allocation6], 1
    %s384 = scalar_lea.sflag [#allocation6], 1
    %385 = vsyncpa %s384, 1
    %386 = vsyncpa [#allocation4], 1
    %s387 = scalar_lea.sflag [#allocation4], 1
    %388 = vsyncpa %s387, 1

</llo_original>
